<compile_context>
chip_gen: v5e
topology: v5e:2x2
jax: 0.10.0
libtpu: 0.0.40
codegen_flags: <defaults>
</compile_context>

<pallas_src>
import functools

import jax
import jax.numpy as jnp
from jax.experimental import pallas as pl
from jax.experimental.pallas import tpu as pltpu


def _round_up(x, m):
    return ((x + m - 1) // m) * m


def _vmem_capacity_bytes():
    """Per-core VMEM capacity; conservative (v7x) default if the query fails."""
    try:
        info = pltpu.get_tpu_info()
        cap = getattr(info, "vmem_capacity_bytes", None)
        if cap:
            return int(cap)
    except Exception:
        pass
    return 64 << 20


def router_kernel(thr_ref, patch_ref, keys_ref, out_ref, acc_ref, *,
                  temperature, hard_threshold, num_experts,
                  num_padded_experts, inv_spatial):
    # patch_ref: (TN, C, TS)   keys_ref: (C, E_pad)   out_ref: (TN, E_pad)
    # acc_ref:   (TN, C) f32 spatial-sum accumulator (resident across axis 1).
    j = pl.program_id(1)

    # SSP (global average pool): accumulate the spatial sum of this chunk.
    # The dtype cast is fused into the reduction -> no full f32 tile temporary.
    partial = jnp.sum(patch_ref[...], axis=-1, dtype=jnp.float32)   # (TN, C)

    @pl.when(j == 0)
    def _():
        acc_ref[...] = jnp.zeros_like(acc_ref)

    acc_ref[...] += partial

    @pl.when(j == pl.num_programs(1) - 1)
    def _():
        emb = acc_ref[...] * inv_spatial                           # (TN, C)

        # F.normalize(dim=-1) with torch's eps = 1e-12 (rsqrt -> EUP slot).
        sumsq = jnp.sum(emb * emb, axis=-1, keepdims=True)
        emb = emb * jax.lax.rsqrt(jnp.maximum(sumsq, 1e-24))

        # logits = patch_emb @ keys.T; keys pre-transposed to (C, E_pad) so
        # the MXU runs a natural (M,K)x(K,N) contraction, lane-dense output.
        logits = jnp.dot(emb, keys_ref[...],
                         preferred_element_type=jnp.float32)       # (TN, E_pad)

        # Knock padded expert columns out of the softmax (statically skipped
        # when num_experts is already a multiple of 128).
        if num_experts < num_padded_experts:
            col = jax.lax.broadcasted_iota(jnp.int32, logits.shape, 1)
            logits = jnp.where(col < num_experts, logits, -1e30)

        # softmax(dim=-1)
        m = jnp.max(logits, axis=-1, keepdims=True)
        e = jnp.exp(logits - m)
        denom = jnp.sum(e, axis=-1, keepdims=True)
        if hard_threshold:
            # Exact divide: avoids (w > adaptive) boundary flips vs reference.
            w = e / denom
        else:
            w = e * pl.reciprocal(denom, approx=True)

        # adaptive threshold
        max_w = jnp.max(w, axis=-1, keepdims=True)
        adaptive = jnp.clip(thr_ref[0] * (2.0 - max_w), 0.01, 0.8)

        if hard_threshold:
            mask = (w > adaptive).astype(jnp.float32)
        else:
            mask = jax.nn.sigmoid(temperature * (w - adaptive))

        wf = w * mask
        s = jnp.sum(wf, axis=-1, keepdims=True)
        # Exact divide so rows renormalize to 1 (mem-bound kernel: free).
        out_ref[...] = wf / jnp.maximum(s, 1e-8)


def router_forward(patch_nchw, keys, threshold, *,
                   temperature, hard_threshold=False, tile_n=None):
    """patch_nchw: (N, C, H, W); keys: (E, C); returns (N, E) float32.

    Pass the patch tensor as bfloat16 to halve HBM traffic (this kernel is
    bandwidth-bound); compute happens in f32 inside the kernel.
    """
    N, C, H, W = patch_nchw.shape
    E, Ck = keys.shape
    assert Ck == C, "keys channel dim must match patch embedding dim"

    S = H * W
    x = patch_nchw.reshape(N, C, S)
    itemsize = jnp.dtype(x.dtype).itemsize

    # --- Generation-aware VMEM budgeting -----------------------------------
    vmem_cap = _vmem_capacity_bytes()
    if vmem_cap >= (96 << 20):          # v5e / v6e: 128 MiB VMEM
        max_block_bytes = 32 << 20
        vmem_limit_cap = 96 << 20
    else:                               # v7x: 64 MiB VMEM per TensorCore
        max_block_bytes = 12 << 20
        vmem_limit_cap = 40 << 20

    # --- Row tiling: big blocks (mem-bound), but >=4 grid steps when N > 16
    # --- so v7x megacore gives each TensorCore >=2 steps (DMA stays hidden).
    if tile_n is None:
        if N <= 16:
            tile_n = _round_up(max(N, 1), 8)
        else:
            tile_n = min(512, _round_up(pl.cdiv(N, 4), 8))
    tile_n = max(8, _round_up(int(tile_n), 8))

    bytes_per_row = C * S * itemsize
    rows_fit = (max_block_bytes // max(bytes_per_row, 1)) // 8 * 8

    if rows_fit >= 8:
        # Full spatial extent fits in one block: single reduction step.
        tile_n = min(tile_n, int(rows_fit))
        tile_s = S
        s_pad = S
    else:
        # Even an 8-row full-S slab is too big: add a reduction grid axis over
        # the spatial dim (P3 accumulator) so each DMA block stays bounded.
        tile_n = 8
        tile_s = max(128, (max_block_bytes // max(8 * C * itemsize, 1))
                     // 128 * 128)
        tile_s = min(tile_s, _round_up(S, 128))
        s_pad = _round_up(S, tile_s)

    n_pad = _round_up(N, tile_n)
    if (n_pad != N) or (s_pad != S):
        x = jnp.pad(x, ((0, n_pad - N), (0, 0), (0, s_pad - S)))

    # Lane-dense output: pad experts to a multiple of 128 (unmasked vst);
    # keys are pre-transposed to (C, E_pad) for the in-kernel dot.
    e_pad = _round_up(max(E, 1), 128)
    keys_t = jnp.zeros((C, e_pad), jnp.float32).at[:, :E].set(
        keys.astype(jnp.float32).T)

    thr = jnp.asarray([threshold], jnp.float32)

    kernel = functools.partial(
        router_kernel,
        temperature=float(temperature),
        hard_threshold=bool(hard_threshold),
        num_experts=int(E),
        num_padded_experts=int(e_pad),
        inv_spatial=1.0 / float(S),
    )

    grid = (n_pad // tile_n, s_pad // tile_s)

    # VMEM accounting: double-buffered input/output/keys + accumulator +
    # in-kernel f32 temporaries (emb, logits/e/w/wf) + headroom, capped
    # per generation.
    in_block = tile_n * C * tile_s * itemsize
    out_block = tile_n * e_pad * 4
    keys_block = C * e_pad * 4
    acc_block = tile_n * C * 4
    temps = 2 * tile_n * C * 4 + 6 * tile_n * e_pad * 4
    vmem_limit = int(min(
        max(2 * (in_block + out_block + keys_block) + acc_block + temps
            + (4 << 20), 32 << 20),
        vmem_limit_cap))

    grid_spec = pltpu.PrefetchScalarGridSpec(
        num_scalar_prefetch=1,                            # threshold -> SMEM
        grid=grid,
        in_specs=[
            pl.BlockSpec((tile_n, C, tile_s), lambda i, j, thr: (i, 0, j)),
            pl.BlockSpec((C, e_pad), lambda i, j, thr: (0, 0)),
        ],
        out_specs=pl.BlockSpec((tile_n, e_pad), lambda i, j, thr: (i, 0)),
        scratch_shapes=[pltpu.VMEM((tile_n, C), jnp.float32)],
    )

    out = pl.pallas_call(
        kernel,
        out_shape=jax.ShapeDtypeStruct((n_pad, e_pad), jnp.float32),
        grid_spec=grid_spec,
        compiler_params=pltpu.CompilerParams(
            dimension_semantics=("parallel", "arbitrary"),
            vmem_limit_bytes=vmem_limit),
    )(thr, x, keys_t)

    return out[:N, :E]


def router_reference(patch_nchw, keys, threshold, temperature, hard_threshold):
    """Pure-JAX reference mirroring the PyTorch Router.forward."""
    N, C, H, W = patch_nchw.shape
    emb = jnp.mean(patch_nchw.reshape(N, C, H * W).astype(jnp.float32), axis=-1)
    emb = emb / jnp.maximum(
        jnp.sqrt(jnp.sum(emb * emb, axis=-1, keepdims=True)), 1e-12)
    logits = emb @ keys.astype(jnp.float32).T
    w = jax.nn.softmax(logits, axis=-1)
    max_w = jnp.max(w, axis=-1, keepdims=True)
    adaptive = jnp.clip(threshold * (2.0 - max_w), 0.01, 0.8)
    if hard_threshold:
        mask = (w > adaptive).astype(jnp.float32)
    else:
        mask = jax.nn.sigmoid(temperature * (w - adaptive))
    wf = w * mask
    s = jnp.sum(wf, axis=-1, keepdims=True)
    return wf / jnp.maximum(s, 1e-8)


if __name__ == "__main__":
    # Small shapes consistent with the module: B=2, nP=4 -> N = B*nP = 8,
    # channels = C_in + 4 = 8, spatial nH = nW = 16, num_experts = 4.
    B, nP = 2, 4
    N = B * nP
    C = 8
    H = W = 16
    num_experts = 4
    temperature = 10.0
    threshold = 0.3

    key = jax.random.PRNGKey(0)
    k_patch, k_keys = jax.random.split(key)

    patch = jax.random.normal(k_patch, (N, C, H, W), dtype=jnp.float32)

    # Deterministic synthetic "keys" (normally produced by K-Means): random,
    # L2-normalized rows, like the normalized centroids in initialize_keys.
    keys = jax.random.normal(k_keys, (num_experts, C), dtype=jnp.float32)
    keys = keys / jnp.maximum(
        jnp.sqrt(jnp.sum(keys * keys, axis=-1, keepdims=True)), 1e-12)

    # Soft-threshold branch.
    out = router_forward(patch, keys, threshold,
                         temperature=temperature, hard_threshold=False)
    jax.block_until_ready(out)
    assert out.shape == (N, num_experts)
    ref = router_reference(patch, keys, threshold, temperature, False)
    err = float(jnp.max(jnp.abs(out - ref)))
    assert err < 5e-2, f"soft-threshold mismatch vs reference: {err}"

    # Hard-threshold branch.
    out_hard = router_forward(patch, keys, threshold,
                              temperature=temperature, hard_threshold=True)
    jax.block_until_ready(out_hard)
    assert out_hard.shape == (N, num_experts)
    ref_hard = router_reference(patch, keys, threshold, temperature, True)
    err_h = float(jnp.max(jnp.abs(out_hard - ref_hard)))
    assert err_h < 5e-2, f"hard-threshold mismatch vs reference: {err_h}"
    assert bool(jnp.all(jnp.isfinite(out_hard)))

    print("KERNEL_OK")
</pallas_src>

<mosaic_0001>
module attributes {stable_mosaic.version = 11 : i64} {
  func.func @router_kernel(%arg0: i32, %arg1: i32, %arg2: memref<1xf32, #tpu.memory_space<smem>>, %arg3: memref<8x8x256xf32, #tpu.memory_space<vmem>>, %arg4: memref<8x128xf32, #tpu.memory_space<vmem>>, %arg5: memref<8x128xf32, #tpu.memory_space<vmem>>, %arg6: memref<8x8xf32, #tpu.memory_space<vmem>>) attributes {dimension_semantics = [#tpu.dimension_semantics<parallel>, #tpu.dimension_semantics<arbitrary>], iteration_bounds = array<i64: 1, 1>, scalar_prefetch = 1 : i64, scratch_operands = 1 : i64, tpu.core_type = #tpu.core_type<tc>, window_params = [{transform_indices = @transform_0, window_bounds = array<i64: 8, 8, 256>}, {pipeline_mode = #tpu.pipeline_mode<synchronous>, transform_indices = @transform_1, window_bounds = array<i64: 8, 128>}, {transform_indices = @transform_2, window_bounds = array<i64: 8, 128>}]} {
    %c0 = arith.constant 0 : index
    %c0_0 = arith.constant 0 : index
    %c0_1 = arith.constant 0 : index
    %0 = vector.load %arg3[%c0, %c0_0, %c0_1] : memref<8x8x256xf32, #tpu.memory_space<vmem>>, vector<8x8x256xf32>
    %cst = arith.constant dense<0.000000e+00> : vector<8x8xf32>
    %1 = vector.multi_reduction <add>, %0, %cst [2] : vector<8x8x256xf32> to vector<8x8xf32>
    %c0_i32 = arith.constant 0 : i32
    %2 = arith.cmpi eq, %arg1, %c0_i32 : i32
    %3 = arith.extui %2 : i1 to i32
    %c0_i32_2 = arith.constant 0 : i32
    %4 = arith.cmpi ne, %3, %c0_i32_2 : i32
    scf.if %4 {
      %cst_9 = arith.constant 0.000000e+00 : f32
      %11 = vector.broadcast %cst_9 : f32 to vector<8x8xf32>
      %c0_10 = arith.constant 0 : index
      %c0_11 = arith.constant 0 : index
      %12 = vector.load %arg6[%c0_10, %c0_11] : memref<8x8xf32, #tpu.memory_space<vmem>>, vector<8x8xf32>
      tpu.vector_store %arg6[%c0_10, %c0_11], %11 {strides = array<i32>} : memref<8x8xf32, #tpu.memory_space<vmem>>, vector<8x8xf32>,
    } else {
    }
    %c0_3 = arith.constant 0 : index
    %c0_4 = arith.constant 0 : index
    %5 = vector.load %arg6[%c0_3, %c0_4] : memref<8x8xf32, #tpu.memory_space<vmem>>, vector<8x8xf32>
    %6 = arith.addf %5, %1 : vector<8x8xf32>
    %c0_5 = arith.constant 0 : index
    %c0_6 = arith.constant 0 : index
    %7 = vector.load %arg6[%c0_5, %c0_6] : memref<8x8xf32, #tpu.memory_space<vmem>>, vector<8x8xf32>
    tpu.vector_store %arg6[%c0_5, %c0_6], %6 {strides = array<i32>} : memref<8x8xf32, #tpu.memory_space<vmem>>, vector<8x8xf32>,
    %c0_i32_7 = arith.constant 0 : i32
    %8 = arith.cmpi eq, %arg1, %c0_i32_7 : i32
    %9 = arith.extui %8 : i1 to i32
    %c0_i32_8 = arith.constant 0 : i32
    %10 = arith.cmpi ne, %9, %c0_i32_8 : i32
    scf.if %10 {
      %c0_9 = arith.constant 0 : index
      %c0_10 = arith.constant 0 : index
      %11 = vector.load %arg6[%c0_9, %c0_10] : memref<8x8xf32, #tpu.memory_space<vmem>>, vector<8x8xf32>
      %cst_11 = arith.constant 3.906250e-03 : f32
      %12 = vector.broadcast %cst_11 : f32 to vector<8x8xf32>
      %13 = arith.mulf %11, %12 : vector<8x8xf32>
      %14 = arith.mulf %13, %13 : vector<8x8xf32>
      %cst_12 = arith.constant dense<0.000000e+00> : vector<8xf32>
      %15 = vector.multi_reduction <add>, %14, %cst_12 [1] : vector<8x8xf32> to vector<8xf32>
      %16 = vector.shape_cast %15 : vector<8xf32> to vector<8x1xf32>
      %cst_13 = arith.constant 1.000000e-24 : f32
      %17 = vector.broadcast %cst_13 : f32 to vector<8x1xf32>
      %18 = arith.maximumf %16, %17 : vector<8x1xf32>
      %19 = math.rsqrt %18 : vector<8x1xf32>
      %20 = vector.broadcast %19 : vector<8x1xf32> to vector<8x8xf32>
      %21 = arith.mulf %13, %20 : vector<8x8xf32>
      %c0_14 = arith.constant 0 : index
      %c0_15 = arith.constant 0 : index
      %22 = vector.load %arg4[%c0_14, %c0_15] : memref<8x128xf32, #tpu.memory_space<vmem>>, vector<8x128xf32>
      %cst_16 = arith.constant dense<0.000000e+00> : vector<8x128xf32>
      %23 = tpu.matmul %21, %22, %cst_16 {dimension_numbers = #tpu.dot_dimension_numbers<[1], [0], [0], [1], [0, 0, 1, 1], [], []>} : vector<8x8xf32>, vector<8x128xf32>, vector<8x128xf32> -> vector<8x128xf32>
      %24 = tpu.iota {dimensions = array<i32: 1>} : vector<8x128xi32>
      %c4_i32 = arith.constant 4 : i32
      %25 = vector.broadcast %c4_i32 : i32 to vector<8x128xi32>
      %26 = arith.cmpi slt, %24, %25 : vector<8x128xi32>
      %cst_17 = arith.constant -1.000000e+30 : f32
      %27 = vector.broadcast %cst_17 : f32 to vector<8x128xf32>
      %28 = arith.select %26, %23, %27 : vector<8x128xi1>, vector<8x128xf32>
      %cst_18 = arith.constant dense<0xFF800000> : vector<8xf32>
      %29 = vector.multi_reduction <maximumf>, %28, %cst_18 [1] : vector<8x128xf32> to vector<8xf32>
      %30 = vector.shape_cast %29 : vector<8xf32> to vector<8x1xf32>
      %31 = vector.broadcast %30 : vector<8x1xf32> to vector<8x128xf32>
      %32 = arith.subf %28, %31 : vector<8x128xf32>
      %33 = math.exp %32 : vector<8x128xf32>
      %cst_19 = arith.constant dense<0.000000e+00> : vector<8xf32>
      %34 = vector.multi_reduction <add>, %33, %cst_19 [1] : vector<8x128xf32> to vector<8xf32>
      %35 = vector.shape_cast %34 : vector<8xf32> to vector<8x1xf32>
      %36 = tpu.reciprocal %35 {approx = true} : vector<8x1xf32> -> vector<8x1xf32>
      %37 = vector.broadcast %36 : vector<8x1xf32> to vector<8x128xf32>
      %38 = arith.mulf %33, %37 : vector<8x128xf32>
      %cst_20 = arith.constant dense<0xFF800000> : vector<8xf32>
      %39 = vector.multi_reduction <maximumf>, %38, %cst_20 [1] : vector<8x128xf32> to vector<8xf32>
      %40 = vector.shape_cast %39 : vector<8xf32> to vector<8x1xf32>
      %c0_21 = arith.constant 0 : index
      %41 = memref.load %arg2[%c0_21] : memref<1xf32, #tpu.memory_space<smem>>
      %cst_22 = arith.constant 2.000000e+00 : f32
      %42 = vector.broadcast %cst_22 : f32 to vector<8x1xf32>
      %43 = arith.subf %42, %40 : vector<8x1xf32>
      %44 = vector.broadcast %41 : f32 to vector<8x1xf32>
      %45 = arith.mulf %44, %43 : vector<8x1xf32>
      %cst_23 = arith.constant 0.00999999977 : f32
      %cst_24 = arith.constant 8.000000e-01 : f32
      %46 = vector.broadcast %cst_23 : f32 to vector<8x1xf32>
      %47 = arith.maximumf %46, %45 : vector<8x1xf32>
      %48 = vector.broadcast %cst_24 : f32 to vector<8x1xf32>
      %49 = arith.minimumf %48, %47 : vector<8x1xf32>
      %50 = vector.broadcast %49 : vector<8x1xf32> to vector<8x128xf32>
      %51 = arith.subf %38, %50 : vector<8x128xf32>
      %cst_25 = arith.constant 1.000000e+01 : f32
      %52 = vector.broadcast %cst_25 : f32 to vector<8x128xf32>
      %53 = arith.mulf %52, %51 : vector<8x128xf32>
      %54 = arith.negf %53 : vector<8x128xf32>
      %55 = math.exp %54 : vector<8x128xf32>
      %cst_26 = arith.constant 1.000000e+00 : f32
      %56 = vector.broadcast %cst_26 : f32 to vector<8x128xf32>
      %57 = arith.addf %56, %55 : vector<8x128xf32>
      %58 = arith.divf %56, %57 : vector<8x128xf32>
      %59 = arith.mulf %38, %58 : vector<8x128xf32>
      %cst_27 = arith.constant dense<0.000000e+00> : vector<8xf32>
      %60 = vector.multi_reduction <add>, %59, %cst_27 [1] : vector<8x128xf32> to vector<8xf32>
      %61 = vector.shape_cast %60 : vector<8xf32> to vector<8x1xf32>
      %cst_28 = arith.constant 9.99999993E-9 : f32
      %62 = vector.broadcast %cst_28 : f32 to vector<8x1xf32>
      %63 = arith.maximumf %61, %62 : vector<8x1xf32>
      %64 = vector.broadcast %63 : vector<8x1xf32> to vector<8x128xf32>
      %65 = arith.divf %59, %64 : vector<8x128xf32>
      %c0_29 = arith.constant 0 : index
      %c0_30 = arith.constant 0 : index
      %66 = vector.load %arg5[%c0_29, %c0_30] : memref<8x128xf32, #tpu.memory_space<vmem>>, vector<8x128xf32>
      tpu.vector_store %arg5[%c0_29, %c0_30], %65 {strides = array<i32>} : memref<8x128xf32, #tpu.memory_space<vmem>>, vector<8x128xf32>,
    } else {
    }
    return
  }
  func.func @transform_0(%arg0: i32, %arg1: i32, %arg2: memref<1xf32, #tpu.memory_space<smem>>) -> (i32, i32, i32) {
    %c0_i32 = arith.constant 0 : i32
    %c0_i32_0 = arith.constant 0 : i32
    return %arg0, %c0_i32, %arg1 : i32, i32, i32
  }
  func.func @transform_1(%arg0: i32, %arg1: i32, %arg2: memref<1xf32, #tpu.memory_space<smem>>) -> (i32, i32) {
    %c0_i32 = arith.constant 0 : i32
    %c0_i32_0 = arith.constant 0 : i32
    %c0_i32_1 = arith.constant 0 : i32
    return %c0_i32, %c0_i32_0 : i32, i32
  }
  func.func @transform_2(%arg0: i32, %arg1: i32, %arg2: memref<1xf32, #tpu.memory_space<smem>>) -> (i32, i32) {
    %c0_i32 = arith.constant 0 : i32
    %c0_i32_0 = arith.constant 0 : i32
    return %arg0, %c0_i32 : i32, i32
  }
}

</mosaic_0001>

<llo_original>
// kernel: tpu_custom_call.1
$region0: #{tpu_custom_call.1}
  #allocation0 [shape = 'u32[]', space=smem, size = 0x4, offset = 0x4, fixed_abs, tag = 'smem constant byte address 0x4 - core index']
  #allocation1 [shape = 'u32[72,128]{1,0:T(1,128)}', space=vmem, size = 0x9000, scoped, tag = 'internal scratch']
  #allocation2 [shape = 'f32[8,8]{1,0:T(8,128)}', space=vmem, size = 0x1000, scoped, tag = 'scratch operand']
  #allocation3 [shape = 's32[1]{0}', space=sflag, size = 0x4, scoped, tag = 'scoped memory for tpu_custom_call.1']
  #allocation4 [shape = 'f32[1]{0:T(128)S(6)}', space=smem, size = 0x200, scoped, tag = 'prefetched SMEM operand 0']
  %s0 = inlined_call_operand.<no memory space> [shape: f32[1], index: 0, kind: input, shape index: {}]
  %s1 = inlined_call_operand.hbm [shape: f32[8,8,256], index: 1, kind: input, shape index: {}]
  %s2 = inlined_call_operand.hbm [shape: f32[8,128], index: 2, kind: input, shape index: {}]
  %s3 = inlined_call_operand.hbm [shape: f32[8,128], index: 3, kind: output, shape index: {}]
  %s4 = sld [smem:[#allocation0]]
  $region34: #{tpu_custom_call.1} parent=0
    _
  %s6 = ssub.s32 1, %s4
  %s7 = scalar_select 0, %s6, %s4
  %8 = sst [smem:[#allocation4]] %s0
  $region1: #{tpu_custom_call.1} parent=0
    #allocation5 [shape = 'u8[65536]{0}', space=vmem, size = 0x10000, scoped, tag = 'input window, operand 1, single buffered']
    #allocation6 [shape = 's32[1]{0}', space=sflag, size = 0x4, scoped, tag = 'scoped memory for tpu_custom_call.1']
    #allocation7 [shape = 's32[1]{0}', space=sflag, size = 0x4, scoped, tag = 'scoped memory for tpu_custom_call.1']
    #allocation8 [shape = 'u8[4096]{0}', space=vmem, size = 0x1000, scoped, tag = 'input window, operand 2, single buffered']
    #allocation9 [shape = 's32[1]{0}', space=sflag, size = 0x4, scoped, tag = 'scoped memory for tpu_custom_call.1']
    #allocation10 [shape = 'u8[4096]{0}', space=vmem, size = 0x1000, scoped, tag = 'output window, operand 0, single buffered']
    %9 = vsyncpa [#allocation6], 0
    %10 = vsyncpa [#allocation9], 0
    %11 = vsyncpa [#allocation7], 0
    // Predicated region
    $region2: #{tpu_custom_call.1} parent=1 // pred_check
      _
    $region3: #{tpu_custom_call.1} parent=1 // pred_check_branch
      %13 = sbr.rel (0) target = $region5
    $region4: #{tpu_custom_call.1} parent=1 // pred_region
      %15 = vsyncadd [#allocation6], 0
      %s16 = sshll.u32 %s1, 4
      %s17 = int_to_ptr.hbm [resolvable:$true] %s16
      %s18 = sshll.u32 [#allocation5], 4
      %s19 = int_to_ptr.vmem [resolvable:$true] %s18
      %24 = dma.hbm_to_vmem [thread:$0]  %s17, 2048, %s19, [#allocation6], 256, 256, 16
    $region5: #{tpu_custom_call.1} parent=1 // pred_fallthru
      _
    // Predicated region
    $region6: #{tpu_custom_call.1} parent=1 // pred_check
      _
    $region7: #{tpu_custom_call.1} parent=1 // pred_check_branch
      %26 = sbr.rel (0) target = $region9
    $region8: #{tpu_custom_call.1} parent=1 // pred_region
      %28 = vsyncadd [#allocation9], 0
      %s30 = sshll.u32 %s2, 4
      %s31 = int_to_ptr.hbm [resolvable:$true] %s30
      %s32 = sshll.u32 [#allocation8], 4
      %s33 = int_to_ptr.vmem [resolvable:$true] %s32
      %35 = dma.hbm_to_vmem [thread:$0]  %s31, 128, %s33, [#allocation9]
    $region9: #{tpu_custom_call.1} parent=1 // pred_fallthru
      _
    // Predicated region
    $region10: #{tpu_custom_call.1} parent=1 // pred_check
      _
    $region11: #{tpu_custom_call.1} parent=1 // pred_check_branch
      %37 = sbr.rel (0) target = $region13
    $region12: #{tpu_custom_call.1} parent=1 // pred_region
      %39 = dma.done [#allocation6], 2048
    $region13: #{tpu_custom_call.1} parent=1 // pred_fallthru
      _
    // Predicated region
    $region14: #{tpu_custom_call.1} parent=1 // pred_check
      _
    $region15: #{tpu_custom_call.1} parent=1 // pred_check_branch
      %41 = sbr.rel (0) target = $region17
    $region16: #{tpu_custom_call.1} parent=1 // pred_region
      %43 = dma.done [#allocation9], 128
    $region17: #{tpu_custom_call.1} parent=1 // pred_fallthru
      _
    %v44 = vld [vmem:[#allocation5] sm:$0xff]
    %v45 = vld [vmem:[#allocation5 + $0x8] sm:$0xff]
    %v46 = vld [vmem:[#allocation5 + $0x10] sm:$0xff]
    %v47 = vld [vmem:[#allocation5 + $0x18] sm:$0xff]
    %v48 = vld [vmem:[#allocation5 + $0x20] sm:$0xff]
    %v49 = vld [vmem:[#allocation5 + $0x28] sm:$0xff]
    %v50 = vld [vmem:[#allocation5 + $0x30] sm:$0xff]
    %v51 = vld [vmem:[#allocation5 + $0x38] sm:$0xff]
    %v52 = vld [vmem:[#allocation5 + $0x40] sm:$0xff]
    %v53 = vld [vmem:[#allocation5 + $0x48] sm:$0xff]
    %v54 = vld [vmem:[#allocation5 + $0x50] sm:$0xff]
    %v55 = vld [vmem:[#allocation5 + $0x58] sm:$0xff]
    %v56 = vld [vmem:[#allocation5 + $0x60] sm:$0xff]
    %v57 = vld [vmem:[#allocation5 + $0x68] sm:$0xff]
    %v58 = vld [vmem:[#allocation5 + $0x70] sm:$0xff]
    %v59 = vld [vmem:[#allocation5 + $0x78] sm:$0xff]
    %v60 = vadd.f32 %v44, %v45
    %61 = vadd.xlane.f32.xlu0 %v60
    %v62 = vpop.xlane.xlu0 %61
    %v63 = vadd.f32 %v46, %v47
    %64 = vadd.xlane.f32.xlu0 %v63
    %v65 = vpop.xlane.xlu0 %64
    %v66 = vadd.f32 %v48, %v49
    %67 = vadd.xlane.f32.xlu0 %v66
    %v68 = vpop.xlane.xlu0 %67
    %v69 = vadd.f32 %v50, %v51
    %70 = vadd.xlane.f32.xlu0 %v69
    %v71 = vpop.xlane.xlu0 %70
    %v72 = vadd.f32 %v52, %v53
    %73 = vadd.xlane.f32.xlu0 %v72
    %v74 = vpop.xlane.xlu0 %73
    %v75 = vadd.f32 %v54, %v55
    %76 = vadd.xlane.f32.xlu0 %v75
    %v77 = vpop.xlane.xlu0 %76
    %v78 = vadd.f32 %v56, %v57
    %79 = vadd.xlane.f32.xlu0 %v78
    %v80 = vpop.xlane.xlu0 %79
    %v81 = vadd.f32 %v58, %v59
    %82 = vadd.xlane.f32.xlu0 %v81
    %v83 = vpop.xlane.xlu0 %82
    %p84 = scmp.eq.s32.totalorder 0, 0
    // Predicated region
    $region18: #{tpu_custom_call.1} parent=1 // pred_check
      %p85 = pneg %p84
    $region19: #{tpu_custom_call.1} parent=1 // pred_check_branch
      %87 = sbr.rel (%p85) target = $region21
    $region20: #{tpu_custom_call.1} parent=1 // pred_region
      %vm88 = vcmask 64512
      %89 = vst.msk [vmem:[#allocation2] sm:$0xff] %vm88, 0.0
    $region21: #{tpu_custom_call.1} parent=1 // pred_fallthru
      _
    %v90 = vld [vmem:[#allocation2] sm:$0xff]
    %v99 = vlaneseq
    %v100 = vand.u32 %v99, 127
    %v101 = vperm.slane %v62, %v100
    %v102 = vperm.slane %v65, %v100
    %v103 = vperm.slane %v68, %v100
    %v104 = vperm.slane %v71, %v100
    %v105 = vperm.slane %v74, %v100
    %v106 = vperm.slane %v77, %v100
    %v107 = vperm.slane %v80, %v100
    %v108 = vperm.slane %v83, %v100
    %vm109 = vcmask 1041409
    %v110 = vsel %vm109, %v102, %v101
    %vm111 = vcmask 1042434
    %v112 = vsel %vm111, %v103, %v110
    %vm113 = vcmask 1043459
    %v114 = vsel %vm113, %v104, %v112
    %vm115 = vcmask 1044484
    %v116 = vsel %vm115, %v105, %v114
    %vm117 = vcmask 1045509
    %v118 = vsel %vm117, %v106, %v116
    %vm119 = vcmask 1046534
    %v120 = vsel %vm119, %v107, %v118
    %vm121 = vcmask 1047559
    %v122 = vsel %vm121, %v108, %v120
    %v124 = vadd.f32 %v90, %v122
    %vm125 = vcmask 64512
    %126 = vst.msk [vmem:[#allocation2] sm:$0xff] %vm125, %v124
    // Predicated region
    $region22: #{tpu_custom_call.1} parent=1 // pred_check
      %p127 = pneg %p84
    $region23: #{tpu_custom_call.1} parent=1 // pred_check_branch
      %129 = sbr.rel (%p127) target = $region25
    $region24: #{tpu_custom_call.1} parent=1 // pred_region
      %v130 = vld [vmem:[#allocation2] sm:$0xff]
      %v131 = vmul.f32 %v130, 0.00390625
      %v132 = vmul.f32 %v131, %v131
      %v133 = vsel %vm125, %v132, 0.0
      %134 = vadd.xlane.f32.xlu0 %v133
      %v135 = vpop.xlane.xlu0 %134
      %v136 = vmax.f32 %v135, 1e-24
      %v137 = vrsqrt.pop %v136
      %v138 = vmul.f32 %v137, %v136
      %v139 = vmul.f32 %v138, %v137
      %v140 = vmul.f32 0.5, %v139
      %v141 = vsub.f32 1.5, %v140
      %v142 = vmul.f32 %v137, %v141
      %vm143 = vweird.f32 %v136
      %vm144 = vweird.f32 %v137
      %vm145 = vmor %vm143, %vm144
      %v146 = vsel %vm145, %v137, %v142
      %v147 = vmul.f32 %v131, %v146
      %v148 = vld [vmem:[#allocation8] sm:$0xff]
      %v150 = vsel %vm125, %v147, 0
      %152 = vmatpush.msra.mxu0 0.0
      %153 = vmatpush.msra.mxu0 0.0
      %154 = vmatpush.msra.mxu0 0.0
      %155 = vmatpush.msra.mxu0 0.0
      %156 = vmatpush.msra.mxu0 0.0
      %157 = vmatpush.msra.mxu0 0.0
      %158 = vmatpush.msra.mxu0 0.0
      %159 = vmatpush.msra.mxu0 0.0
      %160 = vmatpush.msra.mxu0 0.0
      %161 = vmatpush.msra.mxu0 0.0
      %162 = vmatpush.msra.mxu0 0.0
      %163 = vmatpush.msra.mxu0 0.0
      %164 = vmatpush.msra.mxu0 0.0
      %165 = vmatpush.msra.mxu0 0.0
      %166 = vmatpush.msra.mxu0 0.0
      %167 = vmatpush.msra.mxu0 %v148
      %168 = vmatmul.f32.gmra.mxu0 %v150
      %v169 = vpop.f32.mrf.mxu0
      %v170 = vadd.f32 0.0, %v169
      %171 = vdwg.mxu0
      %vm172 = vcmp.lt.s32.totalorder %v100, 4
      %v173 = vsel %vm172, %v170, -1e+30
      %174 = vmax.xlane.f32.xlu0 %v173
      %v175 = vpop.xlane.xlu0 %174
      %v176 = vsub.f32 %v173, %v175
      %v177 = vmul.f32 %v176, 1.442695
      %v178 = vpow.pop %v177
      %179 = vadd.xlane.f32.xlu0 %v178
      %v180 = vpop.xlane.xlu0 %179
      %v181 = vrcp.pop %v180
      %v182 = vmul.f32 %v178, %v181
      %183 = vmax.xlane.f32.xlu0 %v182
      %v184 = vpop.xlane.xlu0 %183
      %s185 = sld [smem:[#allocation4]]
      %v186 = vsub.f32 2.0, %v184
      %v187 = vstv %s185
      %v188 = vmul.f32 %v187, %v186
      %v189 = vmax.f32 %v188, 0.01
      %v190 = vmin.f32 %v189, 0.8
      %v191 = vsub.f32 %v182, %v190
      %v192 = vmul.f32 %v191, 10.0
      %v193 = vxor.u32 %v192, 2147483648
      %v194 = vmul.f32 %v193, 1.442695
      %v195 = vpow.pop %v194
      %v196 = vadd.f32 %v195, 1.0
      %v197 = vrcp.pop %v196
      %v198 = vmul.f32 %v196, %v197
      %v199 = vsub.f32 1.0, %v198
      %v200 = vmul.f32 %v197, %v199
      %v201 = vadd.f32 %v197, %v200
      %vm202 = vweird.f32 %v196
      %vm203 = vweird.f32 %v197
      %vm204 = vmor %vm202, %vm203
      %v205 = vsel %vm204, %v197, %v201
      %v206 = vand.u32 2147483647, %v196
      %vm207 = vcmp.eq.f32.partialorder %v206, 8.507059e+37
      %v208 = vand.u32 %v196, 2147483648
      %v209 = vor.u32 1.1754944e-38, %v208
      %v210 = vsel %vm207, %v209, %v205
      %v211 = vmul.f32 1.0, %v210
      %v212 = vmul.f32 %v182, %v211
      %213 = vadd.xlane.f32.xlu0 %v212
      %v214 = vpop.xlane.xlu0 %213
      %v215 = vmax.f32 %v214, 1e-08
      %v216 = vrcp.pop %v215
      %v217 = vmul.f32 %v215, %v216
      %v218 = vsub.f32 1.0, %v217
      %v219 = vmul.f32 %v216, %v218
      %v220 = vadd.f32 %v216, %v219
      %vm221 = vweird.f32 %v215
      %vm222 = vweird.f32 %v216
      %vm223 = vmor %vm221, %vm222
      %v224 = vsel %vm223, %v216, %v220
      %v225 = vand.u32 2147483647, %v215
      %vm226 = vcmp.eq.f32.partialorder %v225, 8.507059e+37
      %v227 = vand.u32 %v215, 2147483648
      %v228 = vor.u32 1.1754944e-38, %v227
      %v229 = vsel %vm226, %v228, %v224
      %v230 = vmul.f32 %v212, %v229
      %231 = vst [vmem:[#allocation10] sm:$0xff] %v230
    $region25: #{tpu_custom_call.1} parent=1 // pred_fallthru
      _
    // Predicated region
    $region26: #{tpu_custom_call.1} parent=1 // pred_check
      _
    $region27: #{tpu_custom_call.1} parent=1 // pred_check_branch
      %233 = sbr.rel (0) target = $region29
    $region28: #{tpu_custom_call.1} parent=1 // pred_region
      %235 = vsyncadd [#allocation7], 0
      %s237 = sshll.u32 [#allocation10], 4
      %s238 = int_to_ptr.vmem [resolvable:$true] %s237
      %s239 = sshll.u32 %s3, 4
      %s240 = int_to_ptr.hbm [resolvable:$true] %s239
      %242 = dma.vmem_to_hbm [thread:$0]  %s238, 128, %s240, [#allocation7]
    $region29: #{tpu_custom_call.1} parent=1 // pred_fallthru
      _
    // Predicated region
    $region30: #{tpu_custom_call.1} parent=1 // pred_check
      _
    $region31: #{tpu_custom_call.1} parent=1 // pred_check_branch
      %244 = sbr.rel (0) target = $region33
    $region32: #{tpu_custom_call.1} parent=1 // pred_region
      %246 = dma.done [#allocation7], 128
    $region33: #{tpu_custom_call.1} parent=1 // pred_fallthru
      _
    %247 = vsyncpa [#allocation6], 1
    %248 = vsyncpa [#allocation9], 1
    %249 = vsyncpa [#allocation7], 1

</llo_original>
